<compile_context>
chip_gen: v7x
topology: tpu7x:2x2x1
jax: 0.10.0
libtpu: 0.0.40
codegen_flags: <defaults>
</compile_context>

<pallas_src>
import jax
import jax.numpy as jnp
from jax.experimental import pallas as pl
from jax.experimental.pallas import tpu as pltpu


_K_TILE = 1024  # reduction tile used only when in_f > _K_TILE (f32: 8x128 aligned)


def _round_up(x, m):
    return ((x + m - 1) // m) * m


# ---------------------------------------------------------------------------
# Kernels
# ---------------------------------------------------------------------------
def _head_kernel_fused(x_ref, wt_ref, b_ref, o_ref):
    # Fast path (whole in_f fits one K block): single MXU call, bias fused.
    # x_ref : (TB, K)   wt_ref: (K, out_f)   b_ref: (1, out_f)   o_ref: (TB, out_f)
    acc = jnp.dot(x_ref[...], wt_ref[...], preferred_element_type=jnp.float32)
    o_ref[...] = (acc + b_ref[...]).astype(o_ref.dtype)


def _head_kernel_ktiled(x_ref, wt_ref, b_ref, o_ref, acc_ref):
    # K-tiled path (large in_f): f32 accumulator resident across the k axis.
    k = pl.program_id(1)

    @pl.when(k == 0)
    def _():
        acc_ref[...] = jnp.zeros_like(acc_ref)

    acc_ref[...] += jnp.dot(x_ref[...], wt_ref[...],
                            preferred_element_type=jnp.float32)

    @pl.when(k == pl.num_programs(1) - 1)
    def _():
        o_ref[...] = (acc_ref[...] + b_ref[...]).astype(o_ref.dtype)


# ---------------------------------------------------------------------------
# One-time parameter prep (module init, NOT per forward call)
# ---------------------------------------------------------------------------
def prepare_head_params(weight, bias, dtype=jnp.float32):
    """weight: (out_f, in_f) PyTorch layout; bias: (out_f,).

    Returns (wt, b2d, in_f):
      wt  : (K_pad, out_f) pre-transposed weight; K zero-padded to a multiple
            of _K_TILE only when in_f > _K_TILE (zero K-padding is exact).
      b2d : (1, out_f) bias (kept f32 so the add stays in f32).
    """
    out_f, in_f = weight.shape
    wt = weight.T.astype(dtype)                       # (in_f, out_f)
    if in_f > _K_TILE:
        k_pad = _round_up(in_f, _K_TILE)
        wt = jnp.pad(wt, ((0, k_pad - in_f), (0, 0)))
    b2d = bias.reshape(1, out_f).astype(jnp.float32)
    return wt, b2d, in_f


# ---------------------------------------------------------------------------
# Forward
# ---------------------------------------------------------------------------
def head_forward(x, wt, b2d, in_f):
    """x: (B, in_f); wt: (K_pad, out_f); b2d: (1, out_f). Returns (B, out_f)."""
    B = x.shape[0]
    assert x.shape[1] == in_f
    k_pad, out_f = wt.shape
    x_elem = jnp.dtype(x.dtype).itemsize
    p_elem = jnp.dtype(wt.dtype).itemsize
    sub = 8 if x_elem >= 4 else 16                    # min sublane tile (f32 / bf16)

    # Pad x along K only when the layer needs K tiling (exact: zero padding).
    if k_pad != in_f:
        x = jnp.pad(x, ((0, 0), (0, k_pad - in_f)))

    if k_pad > _K_TILE:
        tk, n_k = _K_TILE, k_pad // _K_TILE
    else:
        tk, n_k = k_pad, 1

    # --- generation-aware VMEM budget -------------------------------------
    try:
        vmem_cap = int(pltpu.get_tpu_info().vmem_capacity_bytes)
    except Exception:  # conservative fallback (v7x per-TC physical VMEM)
        vmem_cap = 64 * 1024 * 1024
    budget = max(4 << 20, min(vmem_cap // 2 - (8 << 20), 28 << 20))

    if n_k == 1:
        # weight + bias resident, single-buffered
        resident = tk * out_f * p_elem + out_f * 4
        per_row = (tk * x_elem + out_f * x_elem) * 2            # x + out, 2-deep
    else:
        # weight block changes with k -> double-buffered; + f32 accumulator
        resident = tk * out_f * p_elem * 2 + out_f * 4
        per_row = (tk * x_elem + out_f * x_elem) * 2 + out_f * 4

    tb = max(sub, ((budget - resident) // max(per_row, 1)) // sub * sub)
    tb = int(min(tb, 1024, _round_up(B, sub)))
    # >= 2 grid steps along the parallel batch axis when there is enough work
    # (v7x megacore gets one step per TC; single-TC chips get DMA/MXU overlap).
    if B >= 2 * sub:
        tb = min(tb, _round_up(pl.cdiv(B, 2), sub))
    n_b = pl.cdiv(B, tb)

    vmem_limit = int(min(vmem_cap,
                         max(budget + (8 << 20), resident + sub * per_row + (4 << 20))))

    cost = pl.CostEstimate(
        flops=2 * B * k_pad * out_f,
        transcendentals=0,
        bytes_accessed=(x_elem * B * k_pad + p_elem * k_pad * out_f
                        + 4 * out_f + x_elem * B * out_f),
    )

    def build(single_buffer_resident):
        res_kw = ({"pipeline_mode": pl.Buffered(1)}
                  if single_buffer_resident else {})
        if n_k == 1:
            grid_spec = pltpu.PrefetchScalarGridSpec(
                num_scalar_prefetch=0,
                grid=(n_b,),
                in_specs=[
                    pl.BlockSpec((tb, tk), lambda i: (i, 0)),             # x tile
                    pl.BlockSpec((tk, out_f), lambda i: (0, 0), **res_kw),  # weight
                    pl.BlockSpec((1, out_f), lambda i: (0, 0), **res_kw),   # bias
                ],
                out_specs=pl.BlockSpec((tb, out_f), lambda i: (i, 0)),
            )
            kernel = _head_kernel_fused
            dims = ("parallel",)
        else:
            grid_spec = pltpu.PrefetchScalarGridSpec(
                num_scalar_prefetch=0,
                grid=(n_b, n_k),
                in_specs=[
                    pl.BlockSpec((tb, tk), lambda i, k: (i, k)),
                    pl.BlockSpec((tk, out_f), lambda i, k: (k, 0)),
                    pl.BlockSpec((1, out_f), lambda i, k: (0, 0), **res_kw),
                ],
                out_specs=pl.BlockSpec((tb, out_f), lambda i, k: (i, 0)),
                scratch_shapes=[pltpu.VMEM((tb, out_f), jnp.float32)],
            )
            kernel = _head_kernel_ktiled
            dims = ("parallel", "arbitrary")
        return pl.pallas_call(
            kernel,
            out_shape=jax.ShapeDtypeStruct((B, out_f), x.dtype),
            grid_spec=grid_spec,
            compiler_params=pltpu.CompilerParams(
                dimension_semantics=dims,
                vmem_limit_bytes=vmem_limit,
            ),
            cost_estimate=cost,
        )

    try:
        return build(True)(x, wt, b2d)
    except Exception:
        # pipeline_mode=pl.Buffered(1) not supported on this jax build; the
        # default double-buffered resident blocks are still correct.
        return build(False)(x, wt, b2d)


if __name__ == "__main__":
    # Small shapes consistent with Head(in_f, out_f)
    B, in_f, out_f = 8, 32, 16

    key = jax.random.PRNGKey(0)
    kx, kw, kb = jax.random.split(key, 3)

    x = jax.random.normal(kx, (B, in_f), dtype=jnp.float32)
    # Deterministic parameter init (mimics nn.Linear's uniform bound 1/sqrt(in_f))
    bound = 1.0 / jnp.sqrt(jnp.float32(in_f))
    weight = jax.random.uniform(kw, (out_f, in_f), jnp.float32, -bound, bound)
    bias = jax.random.uniform(kb, (out_f,), jnp.float32, -bound, bound)

    # One-time prep (init time), then forward.
    wt, b2d, k_real = prepare_head_params(weight, bias)
    out = head_forward(x, wt, b2d, k_real)
    jax.block_until_ready(out)

    # Reference check against plain JAX
    ref = x @ weight.T + bias
    assert out.shape == (B, out_f)
    assert jnp.allclose(out, ref, atol=1e-5, rtol=1e-5)

    print("KERNEL_OK")
</pallas_src>

<mosaic_0001>
module attributes {stable_mosaic.version = 11 : i64} {
  func.func @_head_kernel_fused(%arg0: i32, %arg1: memref<8x32xf32, #tpu.memory_space<vmem>>, %arg2: memref<32x16xf32, #tpu.memory_space<vmem>>, %arg3: memref<1x16xf32, #tpu.memory_space<vmem>>, %arg4: memref<8x16xf32, #tpu.memory_space<vmem>>) attributes {dimension_semantics = [#tpu.dimension_semantics<parallel>], iteration_bounds = array<i64: 1>, scalar_prefetch = 0 : i64, scratch_operands = 0 : i64, tpu.core_type = #tpu.core_type<tc>, window_params = [{transform_indices = @transform_0, window_bounds = array<i64: 8, 32>}, {pipeline_mode = #tpu.pipeline_mode<synchronous>, transform_indices = @transform_1, window_bounds = array<i64: 32, 16>}, {pipeline_mode = #tpu.pipeline_mode<synchronous>, transform_indices = @transform_2, window_bounds = array<i64: 1, 16>}, {transform_indices = @transform_3, window_bounds = array<i64: 8, 16>}]} {
    %c0 = arith.constant 0 : index
    %c0_0 = arith.constant 0 : index
    %0 = vector.load %arg1[%c0, %c0_0] : memref<8x32xf32, #tpu.memory_space<vmem>>, vector<8x32xf32>
    %c0_1 = arith.constant 0 : index
    %c0_2 = arith.constant 0 : index
    %1 = vector.load %arg2[%c0_1, %c0_2] : memref<32x16xf32, #tpu.memory_space<vmem>>, vector<32x16xf32>
    %cst = arith.constant dense<0.000000e+00> : vector<8x16xf32>
    %2 = tpu.matmul %0, %1, %cst {dimension_numbers = #tpu.dot_dimension_numbers<[1], [0], [0], [1], [0, 0, 1, 1], [], []>} : vector<8x32xf32>, vector<32x16xf32>, vector<8x16xf32> -> vector<8x16xf32>
    %c0_3 = arith.constant 0 : index
    %c0_4 = arith.constant 0 : index
    %3 = vector.load %arg3[%c0_3, %c0_4] : memref<1x16xf32, #tpu.memory_space<vmem>>, vector<1x16xf32>
    %4 = vector.broadcast %3 : vector<1x16xf32> to vector<8x16xf32>
    %5 = arith.addf %2, %4 : vector<8x16xf32>
    %c0_5 = arith.constant 0 : index
    %c0_6 = arith.constant 0 : index
    %6 = vector.load %arg4[%c0_5, %c0_6] : memref<8x16xf32, #tpu.memory_space<vmem>>, vector<8x16xf32>
    tpu.vector_store %arg4[%c0_5, %c0_6], %5 {strides = array<i32>} : memref<8x16xf32, #tpu.memory_space<vmem>>, vector<8x16xf32>,
    return
  }
  func.func @transform_0(%arg0: i32) -> (i32, i32) {
    %c0_i32 = arith.constant 0 : i32
    %c0_i32_0 = arith.constant 0 : i32
    return %arg0, %c0_i32 : i32, i32
  }
  func.func @transform_1(%arg0: i32) -> (i32, i32) {
    %c0_i32 = arith.constant 0 : i32
    %c0_i32_0 = arith.constant 0 : i32
    %c0_i32_1 = arith.constant 0 : i32
    return %c0_i32, %c0_i32_0 : i32, i32
  }
  func.func @transform_2(%arg0: i32) -> (i32, i32) {
    %c0_i32 = arith.constant 0 : i32
    %c0_i32_0 = arith.constant 0 : i32
    %c0_i32_1 = arith.constant 0 : i32
    return %c0_i32, %c0_i32_0 : i32, i32
  }
  func.func @transform_3(%arg0: i32) -> (i32, i32) {
    %c0_i32 = arith.constant 0 : i32
    %c0_i32_0 = arith.constant 0 : i32
    return %arg0, %c0_i32 : i32, i32
  }
}

module attributes {stable_mosaic.version = 11 : i64} {
  func.func @_head_kernel_fused(%arg0: i32, %arg1: memref<8x32xf32, #tpu.memory_space<vmem>>, %arg2: memref<32x16xf32, #tpu.memory_space<vmem>>, %arg3: memref<1x16xf32, #tpu.memory_space<vmem>>, %arg4: memref<8x16xf32, #tpu.memory_space<vmem>>) attributes {dimension_semantics = [#tpu.dimension_semantics<parallel>], iteration_bounds = array<i64: 1>, scalar_prefetch = 0 : i64, scratch_operands = 0 : i64, tpu.core_type = #tpu.core_type<tc>, window_params = [{transform_indices = @transform_0, window_bounds = array<i64: 8, 32>}, {pipeline_mode = #tpu.pipeline_mode<synchronous>, transform_indices = @transform_1, window_bounds = array<i64: 32, 16>}, {pipeline_mode = #tpu.pipeline_mode<synchronous>, transform_indices = @transform_2, window_bounds = array<i64: 1, 16>}, {transform_indices = @transform_3, window_bounds = array<i64: 8, 16>}]} {
    %c0 = arith.constant 0 : index
    %c0_0 = arith.constant 0 : index
    %0 = vector.load %arg1[%c0, %c0_0] : memref<8x32xf32, #tpu.memory_space<vmem>>, vector<8x32xf32>
    %c0_1 = arith.constant 0 : index
    %c0_2 = arith.constant 0 : index
    %1 = vector.load %arg2[%c0_1, %c0_2] : memref<32x16xf32, #tpu.memory_space<vmem>>, vector<32x16xf32>
    %cst = arith.constant dense<0.000000e+00> : vector<8x16xf32>
    %2 = tpu.matmul %0, %1, %cst {dimension_numbers = #tpu.dot_dimension_numbers<[1], [0], [0], [1], [0, 0, 1, 1], [], []>} : vector<8x32xf32>, vector<32x16xf32>, vector<8x16xf32> -> vector<8x16xf32>
    %c0_3 = arith.constant 0 : index
    %c0_4 = arith.constant 0 : index
    %3 = vector.load %arg3[%c0_3, %c0_4] : memref<1x16xf32, #tpu.memory_space<vmem>>, vector<1x16xf32>
    %4 = vector.broadcast %3 : vector<1x16xf32> to vector<8x16xf32>
    %5 = arith.addf %2, %4 : vector<8x16xf32>
    %c0_5 = arith.constant 0 : index
    %c0_6 = arith.constant 0 : index
    %6 = vector.load %arg4[%c0_5, %c0_6] : memref<8x16xf32, #tpu.memory_space<vmem>>, vector<8x16xf32>
    tpu.vector_store %arg4[%c0_5, %c0_6], %5 {strides = array<i32>} : memref<8x16xf32, #tpu.memory_space<vmem>>, vector<8x16xf32>,
    return
  }
  func.func @transform_0(%arg0: i32) -> (i32, i32) {
    %c0_i32 = arith.constant 0 : i32
    %c0_i32_0 = arith.constant 0 : i32
    return %arg0, %c0_i32 : i32, i32
  }
  func.func @transform_1(%arg0: i32) -> (i32, i32) {
    %c0_i32 = arith.constant 0 : i32
    %c0_i32_0 = arith.constant 0 : i32
    %c0_i32_1 = arith.constant 0 : i32
    return %c0_i32, %c0_i32_0 : i32, i32
  }
  func.func @transform_2(%arg0: i32) -> (i32, i32) {
    %c0_i32 = arith.constant 0 : i32
    %c0_i32_0 = arith.constant 0 : i32
    %c0_i32_1 = arith.constant 0 : i32
    return %c0_i32, %c0_i32_0 : i32, i32
  }
  func.func @transform_3(%arg0: i32) -> (i32, i32) {
    %c0_i32 = arith.constant 0 : i32
    %c0_i32_0 = arith.constant 0 : i32
    return %arg0, %c0_i32 : i32, i32
  }
}

</mosaic_0001>

<llo_original>
// kernel: tpu_custom_call.1
$region0: #{tpu_custom_call.1}
  #allocation0 [shape = 'u32[]', space=smem, size = 0x4, offset = 0x4, fixed_abs, tag = 'smem constant byte address 0x4 - core index']
  #allocation1 [shape = 'u32[144,128]{1,0:T(1,128)}', space=vmem, size = 0x12000, scoped, tag = 'internal scratch']
  %s0 = inlined_call_operand.vmem [shape: f32[8,32], index: 0, kind: input, shape index: {}]
  %s1 = inlined_call_operand.vmem [shape: f32[32,16], index: 1, kind: input, shape index: {}]
  %s2 = inlined_call_operand.vmem [shape: f32[1,16], index: 2, kind: input, shape index: {}]
  %s3 = inlined_call_operand.hbm [shape: f32[8,16], index: 3, kind: output, shape index: {}]
  %s4 = sld [smem:[#allocation0]]
  $region22: #{tpu_custom_call.1} parent=0
    _
  %s6 = ssub.s32 1, %s4
  %s7 = scalar_select 0, %s6, %s4
  $region1: #{tpu_custom_call.1} parent=0
    #allocation2 [shape = 'u8[4096]{0}', space=vmem, size = 0x1000, scoped, tag = 'output window, operand 0, single buffered']
    #allocation3 [shape = 's32[1]{0}', space=sflag, size = 0x4, scoped, tag = 'scoped memory for tpu_custom_call.1']
    %8 = vsyncpa [#allocation3], 0
    // Predicated region
    $region2: #{tpu_custom_call.1} parent=1 // pred_check
      _
    $region3: #{tpu_custom_call.1} parent=1 // pred_check_branch
      %10 = sbr.rel (0) target = $region5
    $region4: #{tpu_custom_call.1} parent=1 // pred_region
      _
    $region5: #{tpu_custom_call.1} parent=1 // pred_fallthru
      _
    // Predicated region
    $region6: #{tpu_custom_call.1} parent=1 // pred_check
      _
    $region7: #{tpu_custom_call.1} parent=1 // pred_check_branch
      %12 = sbr.rel (0) target = $region9
    $region8: #{tpu_custom_call.1} parent=1 // pred_region
      _
    $region9: #{tpu_custom_call.1} parent=1 // pred_fallthru
      _
    // Predicated region
    $region10: #{tpu_custom_call.1} parent=1 // pred_check
      _
    $region11: #{tpu_custom_call.1} parent=1 // pred_check_branch
      %14 = sbr.rel (0) target = $region13
    $region12: #{tpu_custom_call.1} parent=1 // pred_region
      _
    $region13: #{tpu_custom_call.1} parent=1 // pred_fallthru
      _
    %v15 = vld [vmem:[%s0] sm:$0xff]
    %v16 = vld [vmem:[%s1] sm:$0xff]
    %v17 = vld [vmem:[%s1 + $0x8] sm:$0xff]
    %v18 = vld [vmem:[%s1 + $0x10] sm:$0xff]
    %v19 = vld [vmem:[%s1 + $0x18] sm:$0xff]
    %v20 = vld [vmem:[%s2] sm:$0x1]
    %v22 = vlaneseq
    %v23 = vshrl.u32 %v22, 7
    %v24 = vsub.s32 0, %v23
    %v25 = vrot.slane %v20, %v24
    %vm27 = vcmask 261120
    %v29 = vsel %vm27, %v15, 0
    %31 = vmatprep.subr.mxu0 0.0
    %32 = vmatpush1.msra.mxu0 %v16
    %33 = vmatprep.subr.mxu0 0.0
    %34 = vmatpush1.msra.mxu0 %v17
    %35 = vmatprep.subr.mxu0 0.0
    %36 = vmatpush1.msra.mxu0 %v18
    %37 = vmatprep.subr.mxu0 0.0
    %38 = vmatpush1.msra.mxu0 %v19
    %39 = vmatprep.subr.mxu0 0.0
    %40 = vmatpush1.msra.mxu0 0.0
    %41 = vmatprep.subr.mxu0 0.0
    %42 = vmatpush1.msra.mxu0 0.0
    %43 = vmatprep.subr.mxu0 0.0
    %44 = vmatpush1.msra.mxu0 0.0
    %45 = vmatprep.subr.mxu0 0.0
    %46 = vmatpush1.msra.mxu0 0.0
    %47 = vmatprep.subr.mxu0 0.0
    %48 = vmatpush1.msra.mxu0 0.0
    %49 = vmatprep.subr.mxu0 0.0
    %50 = vmatpush1.msra.mxu0 0.0
    %51 = vmatprep.subr.mxu0 0.0
    %52 = vmatpush1.msra.mxu0 0.0
    %53 = vmatprep.subr.mxu0 0.0
    %54 = vmatpush1.msra.mxu0 0.0
    %55 = vmatprep.subr.mxu0 0.0
    %56 = vmatpush1.msra.mxu0 0.0
    %57 = vmatprep.subr.mxu0 0.0
    %58 = vmatpush1.msra.mxu0 0.0
    %59 = vmatprep.subr.mxu0 0.0
    %60 = vmatpush1.msra.mxu0 0.0
    %61 = vmatprep.subr.mxu0 0.0
    %62 = vmatpush1.msra.mxu0 0.0
    %63 = vmatprep.subr.mxu0 0.0
    %64 = vmatpush1.msra.mxu0 0.0
    %65 = vmatprep.subr.mxu0 0.0
    %66 = vmatpush1.msra.mxu0 0.0
    %67 = vmatprep.subr.mxu0 0.0
    %68 = vmatpush1.msra.mxu0 0.0
    %69 = vmatprep.subr.mxu0 0.0
    %70 = vmatpush1.msra.mxu0 0.0
    %71 = vmatprep.subr.mxu0 0.0
    %72 = vmatpush1.msra.mxu0 0.0
    %73 = vmatprep.subr.mxu0 0.0
    %74 = vmatpush1.msra.mxu0 0.0
    %75 = vmatprep.subr.mxu0 0.0
    %76 = vmatpush1.msra.mxu0 0.0
    %77 = vmatprep.subr.mxu0 0.0
    %78 = vmatpush1.msra.mxu0 0.0
    %79 = vmatprep.subr.mxu0 0.0
    %80 = vmatpush1.msra.mxu0 0.0
    %81 = vmatprep.subr.mxu0 0.0
    %82 = vmatpush1.msra.mxu0 0.0
    %83 = vmatprep.subr.mxu0 0.0
    %84 = vmatpush1.msra.mxu0 0.0
    %85 = vmatprep.subr.mxu0 0.0
    %86 = vmatpush1.msra.mxu0 0.0
    %87 = vmatprep.subr.mxu0 0.0
    %88 = vmatpush1.msra.mxu0 0.0
    %89 = vmatprep.subr.mxu0 0.0
    %90 = vmatpush1.msra.mxu0 0.0
    %91 = vmatprep.subr.mxu0 0.0
    %92 = vmatpush1.msra.mxu0 0.0
    %93 = vmatprep.subr.mxu0 0.0
    %94 = vmatpush1.msra.mxu0 0.0
    %95 = vmatprep.mubr.f32.mxu0 0.0
    %96 = vmatmul.mubr.f32.gmra.mrb[0].mxu0 %v29
    %v97 = vpop.f32.mrb[0].mxu0
    %v98 = vadd.f32 %v25, %v97
    %v99 = vpop.f32.mrb[0].mxu0
    %100 = vdwg.mxu0
    %vm101 = vcmask 130048
    %102 = vst.msk [vmem:[#allocation2] sm:$0xff] %vm101, %v98
    // Predicated region
    $region14: #{tpu_custom_call.1} parent=1 // pred_check
      _
    $region15: #{tpu_custom_call.1} parent=1 // pred_check_branch
      %104 = sbr.rel (0) target = $region17
    $region16: #{tpu_custom_call.1} parent=1 // pred_region
      %s106 = ssub.s32 128, 128
      %107 = vsyncadd [#allocation3], %s106
      %s109 = sshll.u32 [#allocation2], 4
      %s110 = int_to_ptr.vmem [resolvable:$true] %s109
      %112 = dma.vmem_to_hbm [thread:$0]  %s110, 128, %s3, [#allocation3]
    $region17: #{tpu_custom_call.1} parent=1 // pred_fallthru
      _
    // Predicated region
    $region18: #{tpu_custom_call.1} parent=1 // pred_check
      _
    $region19: #{tpu_custom_call.1} parent=1 // pred_check_branch
      %114 = sbr.rel (0) target = $region21
    $region20: #{tpu_custom_call.1} parent=1 // pred_region
      %115 = dma.done [#allocation3], 128
    $region21: #{tpu_custom_call.1} parent=1 // pred_fallthru
      _
    %116 = vsyncpa [#allocation3], 1

// kernel: tpu_custom_call.1
$region0: #{tpu_custom_call.1}
  #allocation0 [shape = 'u32[]', space=smem, size = 0x4, offset = 0x4, fixed_abs, tag = 'smem constant byte address 0x4 - core index']
  #allocation1 [shape = 'u32[144,128]{1,0:T(1,128)}', space=vmem, size = 0x12000, scoped, tag = 'internal scratch']
  %s0 = inlined_call_operand.vmem [shape: f32[8,32], index: 0, kind: input, shape index: {}]
  %s1 = inlined_call_operand.vmem [shape: f32[32,16], index: 1, kind: input, shape index: {}]
  %s2 = inlined_call_operand.vmem [shape: f32[1,16], index: 2, kind: input, shape index: {}]
  %s3 = inlined_call_operand.hbm [shape: f32[8,16], index: 3, kind: output, shape index: {}]
  %s4 = sld [smem:[#allocation0]]
  $region22: #{tpu_custom_call.1} parent=0
    _
  %s6 = ssub.s32 1, %s4
  %s7 = scalar_select 0, %s6, %s4
  $region1: #{tpu_custom_call.1} parent=0
    #allocation2 [shape = 'u8[4096]{0}', space=vmem, size = 0x1000, scoped, tag = 'output window, operand 0, single buffered']
    #allocation3 [shape = 's32[1]{0}', space=sflag, size = 0x4, scoped, tag = 'scoped memory for tpu_custom_call.1']
    %8 = vsyncpa [#allocation3], 0
    // Predicated region
    $region2: #{tpu_custom_call.1} parent=1 // pred_check
      _
    $region3: #{tpu_custom_call.1} parent=1 // pred_check_branch
      %10 = sbr.rel (0) target = $region5
    $region4: #{tpu_custom_call.1} parent=1 // pred_region
      _
    $region5: #{tpu_custom_call.1} parent=1 // pred_fallthru
      _
    // Predicated region
    $region6: #{tpu_custom_call.1} parent=1 // pred_check
      _
    $region7: #{tpu_custom_call.1} parent=1 // pred_check_branch
      %12 = sbr.rel (0) target = $region9
    $region8: #{tpu_custom_call.1} parent=1 // pred_region
      _
    $region9: #{tpu_custom_call.1} parent=1 // pred_fallthru
      _
    // Predicated region
    $region10: #{tpu_custom_call.1} parent=1 // pred_check
      _
    $region11: #{tpu_custom_call.1} parent=1 // pred_check_branch
      %14 = sbr.rel (0) target = $region13
    $region12: #{tpu_custom_call.1} parent=1 // pred_region
      _
    $region13: #{tpu_custom_call.1} parent=1 // pred_fallthru
      _
    %v15 = vld [vmem:[%s0] sm:$0xff]
    %v16 = vld [vmem:[%s1] sm:$0xff]
    %v17 = vld [vmem:[%s1 + $0x8] sm:$0xff]
    %v18 = vld [vmem:[%s1 + $0x10] sm:$0xff]
    %v19 = vld [vmem:[%s1 + $0x18] sm:$0xff]
    %v20 = vld [vmem:[%s2] sm:$0x1]
    %v22 = vlaneseq
    %v23 = vshrl.u32 %v22, 7
    %v24 = vsub.s32 0, %v23
    %v25 = vrot.slane %v20, %v24
    %vm27 = vcmask 261120
    %v29 = vsel %vm27, %v15, 0
    %31 = vmatprep.subr.mxu0 0.0
    %32 = vmatpush1.msra.mxu0 %v16
    %33 = vmatprep.subr.mxu0 0.0
    %34 = vmatpush1.msra.mxu0 %v17
    %35 = vmatprep.subr.mxu0 0.0
    %36 = vmatpush1.msra.mxu0 %v18
    %37 = vmatprep.subr.mxu0 0.0
    %38 = vmatpush1.msra.mxu0 %v19
    %39 = vmatprep.subr.mxu0 0.0
    %40 = vmatpush1.msra.mxu0 0.0
    %41 = vmatprep.subr.mxu0 0.0
    %42 = vmatpush1.msra.mxu0 0.0
    %43 = vmatprep.subr.mxu0 0.0
    %44 = vmatpush1.msra.mxu0 0.0
    %45 = vmatprep.subr.mxu0 0.0
    %46 = vmatpush1.msra.mxu0 0.0
    %47 = vmatprep.subr.mxu0 0.0
    %48 = vmatpush1.msra.mxu0 0.0
    %49 = vmatprep.subr.mxu0 0.0
    %50 = vmatpush1.msra.mxu0 0.0
    %51 = vmatprep.subr.mxu0 0.0
    %52 = vmatpush1.msra.mxu0 0.0
    %53 = vmatprep.subr.mxu0 0.0
    %54 = vmatpush1.msra.mxu0 0.0
    %55 = vmatprep.subr.mxu0 0.0
    %56 = vmatpush1.msra.mxu0 0.0
    %57 = vmatprep.subr.mxu0 0.0
    %58 = vmatpush1.msra.mxu0 0.0
    %59 = vmatprep.subr.mxu0 0.0
    %60 = vmatpush1.msra.mxu0 0.0
    %61 = vmatprep.subr.mxu0 0.0
    %62 = vmatpush1.msra.mxu0 0.0
    %63 = vmatprep.subr.mxu0 0.0
    %64 = vmatpush1.msra.mxu0 0.0
    %65 = vmatprep.subr.mxu0 0.0
    %66 = vmatpush1.msra.mxu0 0.0
    %67 = vmatprep.subr.mxu0 0.0
    %68 = vmatpush1.msra.mxu0 0.0
    %69 = vmatprep.subr.mxu0 0.0
    %70 = vmatpush1.msra.mxu0 0.0
    %71 = vmatprep.subr.mxu0 0.0
    %72 = vmatpush1.msra.mxu0 0.0
    %73 = vmatprep.subr.mxu0 0.0
    %74 = vmatpush1.msra.mxu0 0.0
    %75 = vmatprep.subr.mxu0 0.0
    %76 = vmatpush1.msra.mxu0 0.0
    %77 = vmatprep.subr.mxu0 0.0
    %78 = vmatpush1.msra.mxu0 0.0
    %79 = vmatprep.subr.mxu0 0.0
    %80 = vmatpush1.msra.mxu0 0.0
    %81 = vmatprep.subr.mxu0 0.0
    %82 = vmatpush1.msra.mxu0 0.0
    %83 = vmatprep.subr.mxu0 0.0
    %84 = vmatpush1.msra.mxu0 0.0
    %85 = vmatprep.subr.mxu0 0.0
    %86 = vmatpush1.msra.mxu0 0.0
    %87 = vmatprep.subr.mxu0 0.0
    %88 = vmatpush1.msra.mxu0 0.0
    %89 = vmatprep.subr.mxu0 0.0
    %90 = vmatpush1.msra.mxu0 0.0
    %91 = vmatprep.subr.mxu0 0.0
    %92 = vmatpush1.msra.mxu0 0.0
    %93 = vmatprep.subr.mxu0 0.0
    %94 = vmatpush1.msra.mxu0 0.0
    %95 = vmatprep.mubr.f32.mxu0 0.0
    %96 = vmatmul.mubr.f32.gmra.mrb[0].mxu0 %v29
    %v97 = vpop.f32.mrb[0].mxu0
    %v98 = vadd.f32 %v25, %v97
    %v99 = vpop.f32.mrb[0].mxu0
    %100 = vdwg.mxu0
    %vm101 = vcmask 130048
    %102 = vst.msk [vmem:[#allocation2] sm:$0xff] %vm101, %v98
    // Predicated region
    $region14: #{tpu_custom_call.1} parent=1 // pred_check
      _
    $region15: #{tpu_custom_call.1} parent=1 // pred_check_branch
      %104 = sbr.rel (0) target = $region17
    $region16: #{tpu_custom_call.1} parent=1 // pred_region
      %s106 = ssub.s32 128, 128
      %107 = vsyncadd [#allocation3], %s106
      %s109 = sshll.u32 [#allocation2], 4
      %s110 = int_to_ptr.vmem [resolvable:$true] %s109
      %112 = dma.vmem_to_hbm [thread:$0]  %s110, 128, %s3, [#allocation3]
    $region17: #{tpu_custom_call.1} parent=1 // pred_fallthru
      _
    // Predicated region
    $region18: #{tpu_custom_call.1} parent=1 // pred_check
      _
    $region19: #{tpu_custom_call.1} parent=1 // pred_check_branch
      %114 = sbr.rel (0) target = $region21
    $region20: #{tpu_custom_call.1} parent=1 // pred_region
      %115 = dma.done [#allocation3], 128
    $region21: #{tpu_custom_call.1} parent=1 // pred_fallthru
      _
    %116 = vsyncpa [#allocation3], 1

</llo_original>
